<compile_context>
chip_gen: v5e
topology: v5e:2x2
jax: 0.10.0
libtpu: 0.0.40
codegen_flags: <defaults>
</compile_context>

<pallas_src>
import jax
import jax.numpy as jnp
from jax.experimental import pallas as pl
from jax.experimental.pallas import tpu as pltpu


def densenet_kernel(xt_ref, w2e_ref, wcol_ref, scal_ref, out_ref, rhs_ref):
    H = wcol_ref.shape[0]

    x0 = xt_ref[0:1, :]                      # (1, TB) -- batch on lanes
    x1 = xt_ref[1:2, :]                      # (1, TB)

    w1c0 = wcol_ref[:, 0:1]                  # in_hid  weight column for x0   (H, 1)
    w1c1 = wcol_ref[:, 1:2]                  # in_hid  weight column for x1
    b1c = wcol_ref[:, 2:3]                   # in_hid  bias
    w3h1 = wcol_ref[:, 3:4]                  # hid_out weights on hid1
    w3h2 = wcol_ref[:, 4:5]                  # hid_out weights on hid2

    # Stage the raw-input slab [x0; x1; 1; 0*5] into the tail of the layer-2 matmul RHS.
    # Offset H and size 8 are both multiples of 8, so this is a plain aligned store.
    rhs_ref[H:H + 8, :] = xt_ref[...]

    # Layer 1: K=2 contraction as VPU broadcast FMAs (no tiny-K MXU trip); tanh on the
    # EUP.  The result is written straight into the matmul RHS head (no separate h1
    # buffer and no concat copy).
    rhs_ref[0:H, :] = jnp.tanh(w1c0 * x0 + w1c1 * x1 + b1c)              # (H, TB)

    # Layer 2: the single MXU matmul.  K = H+8 folds the raw-input terms and the bias
    # (via the ones row of the input slab) into the contraction, so no extra VPU
    # broadcast-FMA sweeps over (H, TB) are needed.
    h2t = jnp.tanh(jnp.dot(w2e_ref[...], rhs_ref[...],
                           preferred_element_type=jnp.float32))          # (H, TB)

    # Layer 3 (output width 1): elementwise multiply + sublane reduce (VPU + XLU);
    # the scalar raw-input weights / bias come from SMEM.  Output stays lane-dense.
    h1t = rhs_ref[0:H, :]
    z3t = jnp.sum(w3h1 * h1t + w3h2 * h2t, axis=0, keepdims=True)        # (1, TB)
    z3t = z3t + scal_ref[0] * x0 + scal_ref[1] * x1 + scal_ref[2]
    out_ref[...] = jax.nn.sigmoid(z3t)                                   # (1, TB)


def prepare_params(params):
    """One-time packing of PyTorch-convention weights into the kernel layout.

    Hoisted off the per-call hot path.  The feature-major kernel layout consumes
    nn.Linear's (out_features, in_features) matrices directly (no transposes needed).
    """
    H = params["w1"].shape[0]
    w1 = params["w1"].astype(jnp.float32)               # (H, 2)
    b1 = params["b1"].astype(jnp.float32)                # (H,)
    w2 = params["w2"].astype(jnp.float32)                # (H, H+2), cols = [hid1 | x0 | x1]
    b2 = params["b2"].astype(jnp.float32)                # (H,)
    w3 = params["w3"].astype(jnp.float32).reshape(-1)    # (2H+2,) = [hid1 | x0 x1 | hid2]
    b3 = params["b3"].astype(jnp.float32)                # (1,)

    # Extended layer-2 matrix for the folded MXU contraction:
    #   columns = [ W2_hid (H) | w2_x0 | w2_x1 | b2 | zeros(5) ]  -> (H, H+8)
    w2e = jnp.concatenate(
        [w2, b2.reshape(H, 1), jnp.zeros((H, 5), jnp.float32)], axis=1)

    # Remaining small per-hidden-unit columns: (H, 5)
    wcol = jnp.concatenate(
        [w1[:, 0:1], w1[:, 1:2], b1.reshape(H, 1),
         w3[:H].reshape(H, 1), w3[H + 2:].reshape(H, 1)], axis=1)

    scal = jnp.stack([w3[H], w3[H + 1], b3[0]])          # (3,) = [w3_x0, w3_x1, b3]
    return {"w2e": w2e, "wcol": wcol, "scal": scal}


def _round_up(n, m):
    return ((n + m - 1) // m) * m


def densenet_forward(x, prepped, *, block_b=8192):
    """x: (B, 2) f32.  prepped: output of prepare_params().  Returns (B, 1) f32."""
    assert block_b % 256 == 0
    B = x.shape[0]
    H = prepped["wcol"].shape[0]
    Ke = prepped["w2e"].shape[1]                          # H + 8

    # Tile selection (B is static under jit):
    #   * tiny batches  : one block, padded to a lane-dense multiple of 128
    #   * mid batches   : exactly 2 tiles so ("parallel",) feeds both v7x TensorCores
    #   * large batches : block_b-wide tiles (amortizes per-grid-step overhead)
    if B <= 256:
        tb = max(128, _round_up(B, 128))
        b_pad = tb
    elif B <= block_b:
        tb = _round_up(pl.cdiv(B, 2), 128)
        b_pad = 2 * tb
    else:
        tb = block_b
        b_pad = _round_up(B, tb)

    # Feature-major staging slab (8, b_pad): rows = [x0, x1, 1 (bias lane), 0 * 5].
    # Under jit the transpose / pad / concat fuse into one copy pass before the kernel;
    # callers that already hold feature-major data upstream can skip the transpose.
    xt = x.astype(jnp.float32).T                          # (2, B)
    x8 = jnp.concatenate(
        [jnp.pad(xt, ((0, 0), (0, b_pad - B))),
         jnp.ones((1, b_pad), jnp.float32),
         jnp.zeros((5, b_pad), jnp.float32)], axis=0)     # (8, b_pad)

    out_t = pl.pallas_call(
        densenet_kernel,
        out_shape=jax.ShapeDtypeStruct((1, b_pad), jnp.float32),
        grid=(b_pad // tb,),
        in_specs=[
            pl.BlockSpec((8, tb), lambda i: (0, i)),             # input slab: tiled over batch
            pl.BlockSpec((H, Ke), lambda i: (0, 0)),             # extended layer-2 weight: resident
            pl.BlockSpec((H, 5), lambda i: (0, 0)),              # packed small weights: resident
            pl.BlockSpec(memory_space=pltpu.MemorySpace.SMEM),   # 3 scalars in SMEM
        ],
        out_specs=pl.BlockSpec((1, tb), lambda i: (0, i)),       # lane-dense output store
        scratch_shapes=[pltpu.VMEM((H + 8, tb), jnp.float32)],   # layer-2 matmul RHS
        compiler_params=pltpu.CompilerParams(
            dimension_semantics=("parallel",)),                  # shard batch tiles across TCs
    )(x8, prepped["w2e"], prepped["wcol"], prepped["scal"])

    return out_t[:, :B].T                                        # (B, 1)


def init_params(key, num_hid):
    """Deterministic init matching nn.Linear shapes (PyTorch (out, in) convention)."""
    ks = jax.random.split(key, 6)

    def uni(k, shape, fan_in):
        bound = 1.0 / jnp.sqrt(jnp.float32(fan_in))
        return jax.random.uniform(k, shape, jnp.float32, -bound, bound)

    H = num_hid
    return {
        "w1": uni(ks[0], (H, 2), 2),
        "b1": uni(ks[1], (H,), 2),
        "w2": uni(ks[2], (H, 2 + H), 2 + H),
        "b2": uni(ks[3], (H,), 2 + H),
        "w3": uni(ks[4], (1, 2 + 2 * H), 2 + 2 * H),
        "b3": uni(ks[5], (1,), 2 + 2 * H),
    }


def densenet_ref(x, params):
    """Pure-JAX reference reproducing the PyTorch forward exactly."""
    h1 = jnp.tanh(x @ params["w1"].T + params["b1"])
    h2 = jnp.tanh(jnp.concatenate([h1, x], axis=1) @ params["w2"].T + params["b2"])
    z3 = jnp.concatenate([h1, x, h2], axis=1) @ params["w3"].T + params["b3"]
    return jax.nn.sigmoid(z3)


if __name__ == "__main__":
    num_hid = 32
    batch = 8

    key = jax.random.PRNGKey(0)
    kx, kp, kx2, kx3 = jax.random.split(key, 4)
    x = jax.random.normal(kx, (batch, 2), jnp.float32)
    params = init_params(kp, num_hid)

    prepped = prepare_params(params)        # one-time weight prep (off the hot path)
    fwd = jax.jit(densenet_forward)

    # Small batch: single block, padded to 128 lanes.
    out = jax.block_until_ready(fwd(x, prepped))
    ref = densenet_ref(x, params)
    assert out.shape == (batch, 1)
    assert jnp.allclose(out, ref, atol=2e-5, rtol=2e-5)

    # Mid batch: 2-tile path (both TensorCores on v7x).
    x_mid = jax.random.normal(kx2, (1000, 2), jnp.float32)
    out_mid = jax.block_until_ready(fwd(x_mid, prepped))
    ref_mid = densenet_ref(x_mid, params)
    assert out_mid.shape == (1000, 1)
    assert jnp.allclose(out_mid, ref_mid, atol=2e-5, rtol=2e-5)

    # Large batch: block_b-wide tiled grid + padding path.
    x_big = jax.random.normal(kx3, (20000, 2), jnp.float32)
    out_big = jax.block_until_ready(fwd(x_big, prepped))
    ref_big = densenet_ref(x_big, params)
    assert out_big.shape == (20000, 1)
    assert jnp.allclose(out_big, ref_big, atol=2e-5, rtol=2e-5)

    print("KERNEL_OK")
</pallas_src>

<mosaic_0001>
module attributes {stable_mosaic.version = 11 : i64} {
  func.func @densenet_kernel(%arg0: i32, %arg1: memref<8x128xf32, #tpu.memory_space<vmem>>, %arg2: memref<32x40xf32, #tpu.memory_space<vmem>>, %arg3: memref<32x5xf32, #tpu.memory_space<vmem>>, %arg4: memref<3xf32, #tpu.memory_space<smem>>, %arg5: memref<1x128xf32, #tpu.memory_space<vmem>>, %arg6: memref<40x128xf32, #tpu.memory_space<vmem>>) attributes {dimension_semantics = [#tpu.dimension_semantics<parallel>], iteration_bounds = array<i64: 1>, scalar_prefetch = 0 : i64, scratch_operands = 1 : i64, tpu.core_type = #tpu.core_type<tc>, window_params = [{transform_indices = @transform_0, window_bounds = array<i64: 8, 128>}, {pipeline_mode = #tpu.pipeline_mode<synchronous>, transform_indices = @transform_1, window_bounds = array<i64: 32, 40>}, {pipeline_mode = #tpu.pipeline_mode<synchronous>, transform_indices = @transform_2, window_bounds = array<i64: 32, 5>}, {transform_indices = @transform_3, window_bounds = array<i64: 3>}, {transform_indices = @transform_4, window_bounds = array<i64: 1, 128>}]} {
    %c0 = arith.constant 0 : index
    %c0_0 = arith.constant 0 : index
    %0 = vector.load %arg1[%c0, %c0_0] : memref<8x128xf32, #tpu.memory_space<vmem>>, vector<1x128xf32>
    %c1 = arith.constant 1 : index
    %c0_1 = arith.constant 0 : index
    %1 = vector.load %arg1[%c1, %c0_1] : memref<8x128xf32, #tpu.memory_space<vmem>>, vector<1x128xf32>
    %c0_2 = arith.constant 0 : index
    %c0_3 = arith.constant 0 : index
    %2 = vector.load %arg3[%c0_2, %c0_3] : memref<32x5xf32, #tpu.memory_space<vmem>>, vector<32x1xf32>
    %c0_4 = arith.constant 0 : index
    %c1_5 = arith.constant 1 : index
    %3 = vector.load %arg3[%c0_4, %c1_5] : memref<32x5xf32, #tpu.memory_space<vmem>>, vector<32x1xf32>
    %c0_6 = arith.constant 0 : index
    %c2 = arith.constant 2 : index
    %4 = vector.load %arg3[%c0_6, %c2] : memref<32x5xf32, #tpu.memory_space<vmem>>, vector<32x1xf32>
    %c0_7 = arith.constant 0 : index
    %c3 = arith.constant 3 : index
    %5 = vector.load %arg3[%c0_7, %c3] : memref<32x5xf32, #tpu.memory_space<vmem>>, vector<32x1xf32>
    %c0_8 = arith.constant 0 : index
    %c4 = arith.constant 4 : index
    %6 = vector.load %arg3[%c0_8, %c4] : memref<32x5xf32, #tpu.memory_space<vmem>>, vector<32x1xf32>
    %c0_9 = arith.constant 0 : index
    %c0_10 = arith.constant 0 : index
    %7 = vector.load %arg1[%c0_9, %c0_10] : memref<8x128xf32, #tpu.memory_space<vmem>>, vector<8x128xf32>
    %c32 = arith.constant 32 : index
    %c0_11 = arith.constant 0 : index
    %8 = vector.load %arg6[%c32, %c0_11] : memref<40x128xf32, #tpu.memory_space<vmem>>, vector<8x128xf32>
    tpu.vector_store %arg6[%c32, %c0_11], %7 {strides = array<i32>} : memref<40x128xf32, #tpu.memory_space<vmem>>, vector<8x128xf32>,
    %9 = vector.broadcast %2 : vector<32x1xf32> to vector<32x128xf32>
    %10 = vector.broadcast %0 : vector<1x128xf32> to vector<32x128xf32>
    %11 = arith.mulf %9, %10 : vector<32x128xf32>
    %12 = vector.broadcast %3 : vector<32x1xf32> to vector<32x128xf32>
    %13 = vector.broadcast %1 : vector<1x128xf32> to vector<32x128xf32>
    %14 = arith.mulf %12, %13 : vector<32x128xf32>
    %15 = arith.addf %11, %14 : vector<32x128xf32>
    %16 = vector.broadcast %4 : vector<32x1xf32> to vector<32x128xf32>
    %17 = arith.addf %15, %16 : vector<32x128xf32>
    %18 = math.tanh %17 : vector<32x128xf32>
    %c0_12 = arith.constant 0 : index
    %c0_13 = arith.constant 0 : index
    %19 = vector.load %arg6[%c0_12, %c0_13] : memref<40x128xf32, #tpu.memory_space<vmem>>, vector<32x128xf32>
    tpu.vector_store %arg6[%c0_12, %c0_13], %18 {strides = array<i32>} : memref<40x128xf32, #tpu.memory_space<vmem>>, vector<32x128xf32>,
    %c0_14 = arith.constant 0 : index
    %c0_15 = arith.constant 0 : index
    %20 = vector.load %arg2[%c0_14, %c0_15] : memref<32x40xf32, #tpu.memory_space<vmem>>, vector<32x40xf32>
    %c0_16 = arith.constant 0 : index
    %c0_17 = arith.constant 0 : index
    %21 = vector.load %arg6[%c0_16, %c0_17] : memref<40x128xf32, #tpu.memory_space<vmem>>, vector<40x128xf32>
    %cst = arith.constant dense<0.000000e+00> : vector<32x128xf32>
    %22 = tpu.matmul %20, %21, %cst {dimension_numbers = #tpu.dot_dimension_numbers<[1], [0], [0], [1], [0, 0, 1, 1], [], []>} : vector<32x40xf32>, vector<40x128xf32>, vector<32x128xf32> -> vector<32x128xf32>
    %23 = math.tanh %22 : vector<32x128xf32>
    %c0_18 = arith.constant 0 : index
    %c0_19 = arith.constant 0 : index
    %24 = vector.load %arg6[%c0_18, %c0_19] : memref<40x128xf32, #tpu.memory_space<vmem>>, vector<32x128xf32>
    %25 = vector.broadcast %5 : vector<32x1xf32> to vector<32x128xf32>
    %26 = arith.mulf %25, %24 : vector<32x128xf32>
    %27 = vector.broadcast %6 : vector<32x1xf32> to vector<32x128xf32>
    %28 = arith.mulf %27, %23 : vector<32x128xf32>
    %29 = arith.addf %26, %28 : vector<32x128xf32>
    %cst_20 = arith.constant dense<0.000000e+00> : vector<128xf32>
    %30 = vector.multi_reduction <add>, %29, %cst_20 [0] : vector<32x128xf32> to vector<128xf32>
    %31 = vector.shape_cast %30 : vector<128xf32> to vector<1x128xf32>
    %c0_21 = arith.constant 0 : index
    %32 = memref.load %arg4[%c0_21] : memref<3xf32, #tpu.memory_space<smem>>
    %33 = vector.broadcast %32 : f32 to vector<1x128xf32>
    %34 = arith.mulf %33, %0 : vector<1x128xf32>
    %35 = arith.addf %31, %34 : vector<1x128xf32>
    %c1_22 = arith.constant 1 : index
    %36 = memref.load %arg4[%c1_22] : memref<3xf32, #tpu.memory_space<smem>>
    %37 = vector.broadcast %36 : f32 to vector<1x128xf32>
    %38 = arith.mulf %37, %1 : vector<1x128xf32>
    %39 = arith.addf %35, %38 : vector<1x128xf32>
    %c2_23 = arith.constant 2 : index
    %40 = memref.load %arg4[%c2_23] : memref<3xf32, #tpu.memory_space<smem>>
    %41 = vector.broadcast %40 : f32 to vector<1x128xf32>
    %42 = arith.addf %39, %41 : vector<1x128xf32>
    %43 = arith.negf %42 : vector<1x128xf32>
    %44 = math.exp %43 : vector<1x128xf32>
    %cst_24 = arith.constant 1.000000e+00 : f32
    %45 = vector.broadcast %cst_24 : f32 to vector<1x128xf32>
    %46 = arith.addf %45, %44 : vector<1x128xf32>
    %47 = arith.divf %45, %46 : vector<1x128xf32>
    %c0_25 = arith.constant 0 : index
    %c0_26 = arith.constant 0 : index
    %48 = vector.load %arg5[%c0_25, %c0_26] : memref<1x128xf32, #tpu.memory_space<vmem>>, vector<1x128xf32>
    tpu.vector_store %arg5[%c0_25, %c0_26], %47 {strides = array<i32>} : memref<1x128xf32, #tpu.memory_space<vmem>>, vector<1x128xf32>,
    return
  }
  func.func @transform_0(%arg0: i32) -> (i32, i32) {
    %c0_i32 = arith.constant 0 : i32
    %c0_i32_0 = arith.constant 0 : i32
    return %c0_i32, %arg0 : i32, i32
  }
  func.func @transform_1(%arg0: i32) -> (i32, i32) {
    %c0_i32 = arith.constant 0 : i32
    %c0_i32_0 = arith.constant 0 : i32
    %c0_i32_1 = arith.constant 0 : i32
    return %c0_i32, %c0_i32_0 : i32, i32
  }
  func.func @transform_2(%arg0: i32) -> (i32, i32) {
    %c0_i32 = arith.constant 0 : i32
    %c0_i32_0 = arith.constant 0 : i32
    %c0_i32_1 = arith.constant 0 : i32
    return %c0_i32, %c0_i32_0 : i32, i32
  }
  func.func @transform_3(%arg0: i32) -> i32 {
    %c0_i32 = arith.constant 0 : i32
    %c0_i32_0 = arith.constant 0 : i32
    return %c0_i32 : i32
  }
  func.func @transform_4(%arg0: i32) -> (i32, i32) {
    %c0_i32 = arith.constant 0 : i32
    %c0_i32_0 = arith.constant 0 : i32
    return %c0_i32, %arg0 : i32, i32
  }
}

</mosaic_0001>

<llo_original>
// kernel: densenet_forward.1
$region0: #{densenet_forward.1}
  #allocation0 [shape = 'u32[]', space=smem, size = 0x4, offset = 0x4, fixed_abs, tag = 'smem constant byte address 0x4 - core index']
  #allocation1 [shape = 'u32[72,128]{1,0:T(1,128)}', space=vmem, size = 0x9000, scoped, tag = 'internal scratch']
  #allocation2 [shape = 'f32[40,128]{1,0:T(8,128)}', space=vmem, size = 0x5000, scoped, tag = 'scratch operand']
  %s0 = inlined_call_operand.vmem [shape: f32[8,128], index: 0, kind: input, shape index: {}]
  %s1 = inlined_call_operand.vmem [shape: f32[32,40], index: 1, kind: input, shape index: {}]
  %s2 = inlined_call_operand.vmem [shape: f32[32,5], index: 2, kind: input, shape index: {}]
  %s3 = inlined_call_operand.vmem [shape: f32[3], index: 3, kind: input, shape index: {}]
  %s4 = inlined_call_operand.vmem [shape: f32[1,128], index: 4, kind: output, shape index: {}]
  %s5 = sld [smem:[#allocation0]]
  $region30: #{densenet_forward.1} parent=0
    _
  %s7 = ssub.s32 1, %s5
  %s8 = scalar_select 0, %s7, %s5
  $region1: #{densenet_forward.1} parent=0
    #allocation3 [shape = 'u8[512]{0}', space=smem, size = 0x200, scoped, tag = 'input window, operand 3, single buffered']
    #allocation4 [shape = 's32[1]{0}', space=sflag, size = 0x4, scoped, tag = 'scoped memory for densenet_forward.1']
    %9 = vsyncpa [#allocation4], 0
    // Predicated region
    $region2: #{densenet_forward.1} parent=1 // pred_check
      _
    $region3: #{densenet_forward.1} parent=1 // pred_check_branch
      %11 = sbr.rel (0) target = $region5
    $region4: #{densenet_forward.1} parent=1 // pred_region
      _
    $region5: #{densenet_forward.1} parent=1 // pred_fallthru
      _
    // Predicated region
    $region6: #{densenet_forward.1} parent=1 // pred_check
      _
    $region7: #{densenet_forward.1} parent=1 // pred_check_branch
      %13 = sbr.rel (0) target = $region9
    $region8: #{densenet_forward.1} parent=1 // pred_region
      _
    $region9: #{densenet_forward.1} parent=1 // pred_fallthru
      _
    // Predicated region
    $region10: #{densenet_forward.1} parent=1 // pred_check
      _
    $region11: #{densenet_forward.1} parent=1 // pred_check_branch
      %15 = sbr.rel (0) target = $region13
    $region12: #{densenet_forward.1} parent=1 // pred_region
      _
    $region13: #{densenet_forward.1} parent=1 // pred_fallthru
      _
    // Predicated region
    $region14: #{densenet_forward.1} parent=1 // pred_check
      _
    $region15: #{densenet_forward.1} parent=1 // pred_check_branch
      %17 = sbr.rel (0) target = $region17
    $region16: #{densenet_forward.1} parent=1 // pred_region
      %19 = vsyncadd [#allocation4], 0
      %s21 = sshll.u32 %s3, 4
      %s22 = int_to_ptr.vmem [resolvable:$true] %s21
      %24 = dma.vmem_to_smem %s22, 16, [#allocation3], [#allocation4]
    $region17: #{densenet_forward.1} parent=1 // pred_fallthru
      _
    // Predicated region
    $region18: #{densenet_forward.1} parent=1 // pred_check
      _
    $region19: #{densenet_forward.1} parent=1 // pred_check_branch
      %26 = sbr.rel (0) target = $region21
    $region20: #{densenet_forward.1} parent=1 // pred_region
      %28 = dma.done [#allocation4], 16
    $region21: #{densenet_forward.1} parent=1 // pred_fallthru
      _
    %29 = sfence
    %v30 = vld [vmem:[%s0] sm:$0x1]
    %v31 = vld [vmem:[%s0 + $0x1] sm:$0x1]
    %v32 = vld [vmem:[%s2] sm:$0xff]
    %v33 = vld [vmem:[%s2 + $0x8] sm:$0xff]
    %v34 = vld [vmem:[%s2 + $0x10] sm:$0xff]
    %v35 = vld [vmem:[%s2 + $0x18] sm:$0xff]
    %v36 = vld [vmem:[%s0] sm:$0xff]
    %37 = vst [vmem:[#allocation2 + $0x20] sm:$0xff] %v36
    %39 = vset.pattern.permute.xlu0 0
    %40 = vperm.xlu0 %39, %v32
    %v41 = vpop.permute.xlu0 %40
    %44 = vset.pattern.permute.xlu0 0
    %45 = vperm.xlu0 %44, %v33
    %v46 = vpop.permute.xlu0 %45
    %49 = vset.pattern.permute.xlu0 0
    %50 = vperm.xlu0 %49, %v34
    %v51 = vpop.permute.xlu0 %50
    %54 = vset.pattern.permute.xlu0 0
    %55 = vperm.xlu0 %54, %v35
    %v56 = vpop.permute.xlu0 %55
    %v58 = vperm.slane %v30, 0
    %v59 = vmul.f32 %v41, %v58
    %v60 = vmul.f32 %v46, %v58
    %v61 = vmul.f32 %v51, %v58
    %v62 = vmul.f32 %v56, %v58
    %63 = vset.pattern.permute.xlu0 1
    %64 = vperm.xlu0 %63, %v32
    %v65 = vpop.permute.xlu0 %64
    %67 = vset.pattern.permute.xlu0 1
    %68 = vperm.xlu0 %67, %v33
    %v69 = vpop.permute.xlu0 %68
    %71 = vset.pattern.permute.xlu0 1
    %72 = vperm.xlu0 %71, %v34
    %v73 = vpop.permute.xlu0 %72
    %75 = vset.pattern.permute.xlu0 1
    %76 = vperm.xlu0 %75, %v35
    %v77 = vpop.permute.xlu0 %76
    %v79 = vperm.slane %v31, 0
    %v80 = vmul.f32 %v65, %v79
    %v81 = vmul.f32 %v69, %v79
    %v82 = vmul.f32 %v73, %v79
    %v83 = vmul.f32 %v77, %v79
    %v84 = vadd.f32 %v59, %v80
    %v85 = vadd.f32 %v60, %v81
    %v86 = vadd.f32 %v61, %v82
    %v87 = vadd.f32 %v62, %v83
    %88 = vset.pattern.permute.xlu0 2
    %89 = vperm.xlu0 %88, %v32
    %v90 = vpop.permute.xlu0 %89
    %92 = vset.pattern.permute.xlu0 2
    %93 = vperm.xlu0 %92, %v33
    %v94 = vpop.permute.xlu0 %93
    %96 = vset.pattern.permute.xlu0 2
    %97 = vperm.xlu0 %96, %v34
    %v98 = vpop.permute.xlu0 %97
    %100 = vset.pattern.permute.xlu0 2
    %101 = vperm.xlu0 %100, %v35
    %v102 = vpop.permute.xlu0 %101
    %v104 = vadd.f32 %v84, %v90
    %v105 = vadd.f32 %v85, %v94
    %v106 = vadd.f32 %v86, %v98
    %v107 = vadd.f32 %v87, %v102
    %v108 = vtanh.pop %v104
    %v109 = vtanh.pop %v105
    %v110 = vtanh.pop %v106
    %v111 = vtanh.pop %v107
    %112 = vst [vmem:[#allocation2] sm:$0xff] %v108
    %113 = vst [vmem:[#allocation2 + $0x8] sm:$0xff] %v109
    %114 = vst [vmem:[#allocation2 + $0x10] sm:$0xff] %v110
    %115 = vst [vmem:[#allocation2 + $0x18] sm:$0xff] %v111
    %v116 = vld [vmem:[%s1] sm:$0xff]
    %v117 = vld [vmem:[%s1 + $0x8] sm:$0xff]
    %v118 = vld [vmem:[%s1 + $0x10] sm:$0xff]
    %v119 = vld [vmem:[%s1 + $0x18] sm:$0xff]
    %v120 = vld [vmem:[#allocation2] sm:$0xff]
    %v121 = vld [vmem:[#allocation2 + $0x8] sm:$0xff]
    %v122 = vld [vmem:[#allocation2 + $0x10] sm:$0xff]
    %v123 = vld [vmem:[#allocation2 + $0x18] sm:$0xff]
    %v124 = vld [vmem:[#allocation2 + $0x20] sm:$0xff]
    %vm125 = vcmask 326656
    %v127 = vsel %vm125, %v116, 0
    %v130 = vsel %vm125, %v117, 0
    %v133 = vsel %vm125, %v118, 0
    %v136 = vsel %vm125, %v119, 0
    %138 = vmatpush.msra.mxu0 0.0
    %139 = vmatpush.msra.mxu0 0.0
    %140 = vmatpush.msra.mxu0 0.0
    %141 = vmatpush.msra.mxu0 0.0
    %142 = vmatpush.msra.mxu0 0.0
    %143 = vmatpush.msra.mxu0 0.0
    %144 = vmatpush.msra.mxu0 0.0
    %145 = vmatpush.msra.mxu0 0.0
    %146 = vmatpush.msra.mxu0 0.0
    %147 = vmatpush.msra.mxu0 0.0
    %148 = vmatpush.msra.mxu0 0.0
    %149 = vmatpush.msra.mxu0 %v124
    %150 = vmatpush.msra.mxu0 %v123
    %151 = vmatpush.msra.mxu0 %v122
    %152 = vmatpush.msra.mxu0 %v121
    %153 = vmatpush.msra.mxu0 %v120
    %154 = vmatmul.f32.gmra.mxu0 %v127
    %v155 = vpop.f32.mrf.mxu0
    %v156 = vadd.f32 0.0, %v155
    %157 = vmatmul.f32.gmra.mxu0 %v130
    %v158 = vpop.f32.mrf.mxu0
    %v159 = vadd.f32 0.0, %v158
    %160 = vmatmul.f32.gmra.mxu0 %v133
    %v161 = vpop.f32.mrf.mxu0
    %v162 = vadd.f32 0.0, %v161
    %163 = vmatmul.f32.gmra.mxu0 %v136
    %v164 = vpop.f32.mrf.mxu0
    %v165 = vadd.f32 0.0, %v164
    %166 = vdwg.mxu0
    %v167 = vtanh.pop %v156
    %v168 = vtanh.pop %v159
    %v169 = vtanh.pop %v162
    %v170 = vtanh.pop %v165
    %v171 = vld [vmem:[#allocation2] sm:$0xff]
    %v172 = vld [vmem:[#allocation2 + $0x8] sm:$0xff]
    %v173 = vld [vmem:[#allocation2 + $0x10] sm:$0xff]
    %v174 = vld [vmem:[#allocation2 + $0x18] sm:$0xff]
    %175 = vset.pattern.permute.xlu0 3
    %176 = vperm.xlu0 %175, %v32
    %v177 = vpop.permute.xlu0 %176
    %179 = vset.pattern.permute.xlu0 3
    %180 = vperm.xlu0 %179, %v33
    %v181 = vpop.permute.xlu0 %180
    %183 = vset.pattern.permute.xlu0 3
    %184 = vperm.xlu0 %183, %v34
    %v185 = vpop.permute.xlu0 %184
    %187 = vset.pattern.permute.xlu0 3
    %188 = vperm.xlu0 %187, %v35
    %v189 = vpop.permute.xlu0 %188
    %v191 = vmul.f32 %v177, %v171
    %v192 = vmul.f32 %v181, %v172
    %v193 = vmul.f32 %v185, %v173
    %v194 = vmul.f32 %v189, %v174
    %195 = vset.pattern.permute.xlu0 4
    %196 = vperm.xlu0 %195, %v32
    %v197 = vpop.permute.xlu0 %196
    %199 = vset.pattern.permute.xlu0 4
    %200 = vperm.xlu0 %199, %v33
    %v201 = vpop.permute.xlu0 %200
    %203 = vset.pattern.permute.xlu0 4
    %204 = vperm.xlu0 %203, %v34
    %v205 = vpop.permute.xlu0 %204
    %207 = vset.pattern.permute.xlu0 4
    %208 = vperm.xlu0 %207, %v35
    %v209 = vpop.permute.xlu0 %208
    %v211 = vmul.f32 %v197, %v167
    %v212 = vmul.f32 %v201, %v168
    %v213 = vmul.f32 %v205, %v169
    %v214 = vmul.f32 %v209, %v170
    %v215 = vadd.f32 %v191, %v211
    %v216 = vadd.f32 %v192, %v212
    %v217 = vadd.f32 %v193, %v213
    %v218 = vadd.f32 %v194, %v214
    %v219 = vadd.f32 %v215, %v216
    %v220 = vadd.f32 %v219, %v217
    %v221 = vadd.f32 %v220, %v218
    %v222 = vrot.slane %v221, 4
    %v223 = vadd.f32 %v221, %v222
    %v224 = vrot.slane %v223, 2
    %v225 = vadd.f32 %v223, %v224
    %v226 = vrot.slane %v225, 1
    %v227 = vadd.f32 %v225, %v226
    %s228 = sld [smem:[#allocation3]]
    %v229 = vstv %s228
    %v230 = vmul.f32 %v229, %v30
    %v231 = vadd.f32 %v227, %v230
    %s232 = sld [smem:[#allocation3 + $0x1]]
    %v233 = vstv %s232
    %v234 = vmul.f32 %v233, %v31
    %v235 = vadd.f32 %v231, %v234
    %s236 = sld [smem:[#allocation3 + $0x2]]
    %v237 = vstv %s236
    %v238 = vadd.f32 %v235, %v237
    %v239 = vxor.u32 %v238, 2147483648
    %v240 = vmul.f32 %v239, 1.442695
    %v241 = vpow.pop %v240
    %v242 = vadd.f32 %v241, 1.0
    %v243 = vrcp.pop %v242
    %v244 = vmul.f32 %v242, %v243
    %v245 = vsub.f32 1.0, %v244
    %v246 = vmul.f32 %v243, %v245
    %v247 = vadd.f32 %v243, %v246
    %vm248 = vweird.f32 %v242
    %vm249 = vweird.f32 %v243
    %vm250 = vmor %vm248, %vm249
    %v251 = vsel %vm250, %v243, %v247
    %v252 = vand.u32 2147483647, %v242
    %vm253 = vcmp.eq.f32.partialorder %v252, 8.507059e+37
    %v254 = vand.u32 %v242, 2147483648
    %v255 = vor.u32 1.1754944e-38, %v254
    %v256 = vsel %vm253, %v255, %v251
    %v257 = vmul.f32 1.0, %v256
    %258 = vst [vmem:[%s4] sm:$0x1] %v257
    // Predicated region
    $region22: #{densenet_forward.1} parent=1 // pred_check
      _
    $region23: #{densenet_forward.1} parent=1 // pred_check_branch
      %260 = sbr.rel (0) target = $region25
    $region24: #{densenet_forward.1} parent=1 // pred_region
      _
    $region25: #{densenet_forward.1} parent=1 // pred_fallthru
      _
    // Predicated region
    $region26: #{densenet_forward.1} parent=1 // pred_check
      _
    $region27: #{densenet_forward.1} parent=1 // pred_check_branch
      %262 = sbr.rel (0) target = $region29
    $region28: #{densenet_forward.1} parent=1 // pred_region
      _
    $region29: #{densenet_forward.1} parent=1 // pred_fallthru
      _
    %263 = vsyncpa [#allocation4], 1

</llo_original>
